<compile_context>
chip_gen: v5e
topology: v5e:2x2
jax: 0.10.0
libtpu: 0.0.40
codegen_flags: <defaults>
</compile_context>

<pallas_src>
import functools

import jax
import jax.numpy as jnp
from jax import lax
from jax.experimental import pallas as pl
from jax.experimental.pallas import tpu as pltpu

_LANE = 128
_SUBLANE = 8
_C = 3                     # coordinate dimension of the trajectory points
_W = _LANE * _C            # 384 = lcm(128, 3): row width, 3 vregs per row


def _round_up(x, m):
    return ((x + m - 1) // m) * m


def _default_num_cores():
    """2 for chips with two TensorCores per device (v7x / v4 / v5p), else 1."""
    try:
        kind = jax.devices()[0].device_kind.lower()
    except Exception:
        return 1
    return 2 if ("v7" in kind or "v4" in kind or "v5p" in kind) else 1


def _loss_kernel(out_ref, tgt_ref, mask_ref, part_ref, acc_ref,
                 *, rows, tr, steps_per_core):
    """One grid step over a lane-dense (tr, 384) tile.

    Grid is (num_cores, steps): axis 0 is "parallel" (megacore sharding on
    2-TC chips), axis 1 streams the reduction.  acc_ref is a per-core
    (tr, 384) per-lane partial-sum accumulator.
    """
    c = pl.program_id(0)
    i = pl.program_id(1)

    @pl.when(i == 0)
    def _init():
        acc_ref[...] = jnp.zeros_like(acc_ref)

    # Elementwise squared difference (VPU); cast in-kernel so bf16 inputs
    # stream at half the HBM traffic.
    d = tgt_ref[...].astype(jnp.float32) - out_ref[...].astype(jnp.float32)
    sq = d * d

    # Row layout is [p0x p0y p0z p1x ...]: summing each lane with its two
    # lane-neighbours (symmetric +-1 rolls -> direction-agnostic) puts the
    # full squared norm of point k on lane 3k+1.  Rolls run on the XLU and
    # overlap the VPU work; wrap-around only pollutes masked lanes.
    s = sq + pltpu.roll(sq, shift=1, axis=1) + pltpu.roll(sq, shift=_W - 1, axis=1)

    # Row-bounds handling: only the single block straddling `rows` (or a
    # clamped "ghost" block) takes the masked path; interior blocks are fast.
    row0 = (c * steps_per_core + i) * tr
    rows_valid = rows - row0

    @pl.when(rows_valid >= tr)
    def _fast():
        acc_ref[...] += jnp.sqrt(s)

    @pl.when(rows_valid < tr)
    def _masked():
        r = lax.broadcasted_iota(jnp.int32, s.shape, 0)
        acc_ref[...] += jnp.sqrt(jnp.where(r < rows_valid, s, 0.0))

    @pl.when(i == pl.num_programs(1) - 1)
    def _finalize():
        # Single cross-lane/sublane reduce per core: keep only the
        # middle-coordinate lane of every 3-lane group.
        part_ref[...] = jnp.sum(acc_ref[...] * mask_ref[...]).reshape(1, 1, 1)


def loss_func(output, target, *, tile_sublanes=512, num_cores=None,
              force_kernel=False):
    """1000 * mean(||target - output||_2 over the last dim) as a Pallas kernel."""
    assert output.shape == target.shape
    assert output.ndim == 4, "expected (B, T, J, C) like the PyTorch module"
    B, T, J, C = output.shape
    N = B * T * J

    # Generic-C or tiny inputs: plain XLA (kernel launch overhead > work).
    # TODO(synk): the lane-grouping trick below is specialized to C == 3.
    if C != _C or (not force_kernel and N * C < 4096):
        d = target.astype(jnp.float32) - output.astype(jnp.float32)
        return 1000.0 * jnp.mean(jnp.sqrt(jnp.sum(d * d, axis=3)))

    total = N * C
    pad = (-total) % _W

    def _prep(x):
        flat = x.reshape(total)                        # free row-major collapse
        if pad:
            flat = jnp.pad(flat, (0, pad))             # only when N % 128 != 0
        return flat.reshape((total + pad) // _W, _W)   # free row-major split

    x2 = _prep(output)
    y2 = _prep(target)
    rows = x2.shape[0]

    # Lane mask selecting the middle-coordinate lane of each 3-lane group.
    lane_mask = jnp.tile(jnp.array([0.0, 1.0, 0.0], jnp.float32),
                         _LANE).reshape(1, _W)

    if num_cores is None:
        num_cores = _default_num_cores()
    if rows < 64:                       # not worth splitting across TensorCores
        num_cores = 1

    tile_sublanes = max(_SUBLANE, (tile_sublanes // _SUBLANE) * _SUBLANE)
    rpc = pl.cdiv(rows, num_cores)                       # rows per core
    tr = min(tile_sublanes, _round_up(rpc, _SUBLANE))
    if rpc > 2 * _SUBLANE:
        # Guarantee >=2 pipelined steps per core so DMA overlaps compute.
        tr = min(tr, _round_up(pl.cdiv(rpc, 2), _SUBLANE))
    if num_cores == 1 and tr > rows:
        tr = rows                        # single block covering the full dim
    steps_per_core = pl.cdiv(rpc, tr)
    last_block = pl.cdiv(rows, tr) - 1   # clamp target for ghost blocks

    def in_map(c, i):
        # Clamp so logically out-of-range blocks re-read the last valid block;
        # their contribution is masked to zero inside the kernel.
        return (jnp.minimum(c * steps_per_core + i, last_block), 0)

    if num_cores > 1 and steps_per_core >= 3:
        # v7x: a third buffer absorbs DMA jitter from cross-core HBM contention.
        in_spec = pl.BlockSpec((tr, _W), in_map, pipeline_mode=pl.Buffered(3))
    else:
        in_spec = pl.BlockSpec((tr, _W), in_map)
    mask_spec = pl.BlockSpec((1, _W), lambda c, i: (0, 0))

    kernel = functools.partial(_loss_kernel, rows=rows, tr=tr,
                               steps_per_core=steps_per_core)

    partials = pl.pallas_call(
        kernel,
        out_shape=jax.ShapeDtypeStruct((num_cores, 1, 1), jnp.float32),
        grid_spec=pltpu.PrefetchScalarGridSpec(
            num_scalar_prefetch=0,
            grid=(num_cores, steps_per_core),
            in_specs=[in_spec, in_spec, mask_spec],
            out_specs=pl.BlockSpec((1, 1, 1), lambda c, i: (c, 0, 0)),
            scratch_shapes=[pltpu.VMEM((tr, _W), jnp.float32)],
        ),
        # Axis 0 shards across TensorCores on 2-TC chips; on 1-TC chips it has
        # size 1.  Axis 1 carries the accumulator, so it is "arbitrary".
        compiler_params=pltpu.CompilerParams(
            dimension_semantics=("parallel", "arbitrary"),
        ),
    )(x2, y2, lane_mask)

    # Padded / masked points contribute exactly 0; divide by the true count N.
    return 1000.0 * jnp.sum(partials) / N


if __name__ == "__main__":
    # Small shapes consistent with 3D trajectory prediction: (B, T, J, 3).
    key = jax.random.PRNGKey(0)
    k1, k2 = jax.random.split(key)
    B, T, J, C = 2, 8, 16, 3
    output = jax.random.normal(k1, (B, T, J, C), dtype=jnp.float32)
    target = jax.random.normal(k2, (B, T, J, C), dtype=jnp.float32)

    # force_kernel=True so the Pallas path runs even at this tiny test size.
    loss = loss_func(output, target, force_kernel=True)
    jax.block_until_ready(loss)

    # Silent correctness check against a pure-JAX reference.
    ref = 1000.0 * jnp.mean(
        jnp.linalg.norm(target - output, ord=2, axis=3, keepdims=True)
    )
    assert jnp.allclose(loss, ref, rtol=1e-5, atol=1e-3), (loss, ref)

    print("KERNEL_OK")
</pallas_src>

<mosaic_0001>
module attributes {stable_mosaic.version = 11 : i64} {
  func.func @_loss_kernel(%arg0: i32, %arg1: i32, %arg2: memref<2x384xf32, #tpu.memory_space<vmem>>, %arg3: memref<2x384xf32, #tpu.memory_space<vmem>>, %arg4: memref<1x384xf32, #tpu.memory_space<vmem>>, %arg5: memref<1x1x1xf32, #tpu.memory_space<vmem>>, %arg6: memref<2x384xf32, #tpu.memory_space<vmem>>) attributes {dimension_semantics = [#tpu.dimension_semantics<parallel>, #tpu.dimension_semantics<arbitrary>], iteration_bounds = array<i64: 1, 1>, scalar_prefetch = 0 : i64, scratch_operands = 1 : i64, tpu.core_type = #tpu.core_type<tc>, window_params = [{transform_indices = @transform_0, window_bounds = array<i64: 2, 384>}, {transform_indices = @transform_1, window_bounds = array<i64: 2, 384>}, {pipeline_mode = #tpu.pipeline_mode<synchronous>, transform_indices = @transform_2, window_bounds = array<i64: 1, 384>}, {transform_indices = @transform_3, window_bounds = array<i64: 1, 1, 1>}]} {
    %c0_i32 = arith.constant 0 : i32
    %0 = arith.cmpi eq, %arg1, %c0_i32 : i32
    %1 = arith.extui %0 : i1 to i32
    %c0_i32_0 = arith.constant 0 : i32
    %2 = arith.cmpi ne, %1, %c0_i32_0 : i32
    scf.if %2 {
      %cst = arith.constant 0.000000e+00 : f32
      %24 = vector.broadcast %cst : f32 to vector<2x384xf32>
      %c0_12 = arith.constant 0 : index
      %c0_13 = arith.constant 0 : index
      %25 = vector.load %arg6[%c0_12, %c0_13] : memref<2x384xf32, #tpu.memory_space<vmem>>, vector<2x384xf32>
      tpu.vector_store %arg6[%c0_12, %c0_13], %24 {strides = array<i32>} : memref<2x384xf32, #tpu.memory_space<vmem>>, vector<2x384xf32>,
    } else {
    }
    %c0 = arith.constant 0 : index
    %c0_1 = arith.constant 0 : index
    %3 = vector.load %arg3[%c0, %c0_1] : memref<2x384xf32, #tpu.memory_space<vmem>>, vector<2x384xf32>
    %c0_2 = arith.constant 0 : index
    %c0_3 = arith.constant 0 : index
    %4 = vector.load %arg2[%c0_2, %c0_3] : memref<2x384xf32, #tpu.memory_space<vmem>>, vector<2x384xf32>
    %5 = arith.subf %3, %4 : vector<2x384xf32>
    %6 = arith.mulf %5, %5 : vector<2x384xf32>
    %c1_i32 = arith.constant 1 : i32
    %7 = tpu.dynamic_rotate %6 by %c1_i32 dim 1 : vector<2x384xf32>, i32 -> vector<2x384xf32>
    %8 = arith.addf %6, %7 : vector<2x384xf32>
    %c383_i32 = arith.constant 383 : i32
    %9 = tpu.dynamic_rotate %6 by %c383_i32 dim 1 : vector<2x384xf32>, i32 -> vector<2x384xf32>
    %10 = arith.addf %8, %9 : vector<2x384xf32>
    %c1_i32_4 = arith.constant 1 : i32
    %11 = arith.muli %arg0, %c1_i32_4 : i32
    %12 = arith.addi %11, %arg1 : i32
    %c2_i32 = arith.constant 2 : i32
    %13 = arith.muli %12, %c2_i32 : i32
    %c2_i32_5 = arith.constant 2 : i32
    %14 = arith.subi %c2_i32_5, %13 : i32
    %c2_i32_6 = arith.constant 2 : i32
    %15 = arith.cmpi sge, %14, %c2_i32_6 : i32
    %16 = arith.extui %15 : i1 to i32
    %c0_i32_7 = arith.constant 0 : i32
    %17 = arith.cmpi ne, %16, %c0_i32_7 : i32
    scf.if %17 {
      %c0_12 = arith.constant 0 : index
      %c0_13 = arith.constant 0 : index
      %24 = vector.load %arg6[%c0_12, %c0_13] : memref<2x384xf32, #tpu.memory_space<vmem>>, vector<2x384xf32>
      %25 = math.sqrt %10 : vector<2x384xf32>
      %26 = arith.addf %24, %25 : vector<2x384xf32>
      %c0_14 = arith.constant 0 : index
      %c0_15 = arith.constant 0 : index
      %27 = vector.load %arg6[%c0_14, %c0_15] : memref<2x384xf32, #tpu.memory_space<vmem>>, vector<2x384xf32>
      tpu.vector_store %arg6[%c0_14, %c0_15], %26 {strides = array<i32>} : memref<2x384xf32, #tpu.memory_space<vmem>>, vector<2x384xf32>,
    } else {
    }
    %c2_i32_8 = arith.constant 2 : i32
    %18 = arith.cmpi slt, %14, %c2_i32_8 : i32
    %19 = arith.extui %18 : i1 to i32
    %c0_i32_9 = arith.constant 0 : i32
    %20 = arith.cmpi ne, %19, %c0_i32_9 : i32
    scf.if %20 {
      %24 = tpu.iota {dimensions = array<i32: 0>} : vector<2x384xi32>
      %c0_12 = arith.constant 0 : index
      %c0_13 = arith.constant 0 : index
      %25 = vector.load %arg6[%c0_12, %c0_13] : memref<2x384xf32, #tpu.memory_space<vmem>>, vector<2x384xf32>
      %26 = vector.broadcast %14 : i32 to vector<2x384xi32>
      %27 = arith.cmpi slt, %24, %26 : vector<2x384xi32>
      %cst = arith.constant 0.000000e+00 : f32
      %28 = vector.broadcast %cst : f32 to vector<2x384xf32>
      %29 = arith.select %27, %10, %28 : vector<2x384xi1>, vector<2x384xf32>
      %30 = math.sqrt %29 : vector<2x384xf32>
      %31 = arith.addf %25, %30 : vector<2x384xf32>
      %c0_14 = arith.constant 0 : index
      %c0_15 = arith.constant 0 : index
      %32 = vector.load %arg6[%c0_14, %c0_15] : memref<2x384xf32, #tpu.memory_space<vmem>>, vector<2x384xf32>
      tpu.vector_store %arg6[%c0_14, %c0_15], %31 {strides = array<i32>} : memref<2x384xf32, #tpu.memory_space<vmem>>, vector<2x384xf32>,
    } else {
    }
    %c0_i32_10 = arith.constant 0 : i32
    %21 = arith.cmpi eq, %arg1, %c0_i32_10 : i32
    %22 = arith.extui %21 : i1 to i32
    %c0_i32_11 = arith.constant 0 : i32
    %23 = arith.cmpi ne, %22, %c0_i32_11 : i32
    scf.if %23 {
      %c0_12 = arith.constant 0 : index
      %c0_13 = arith.constant 0 : index
      %24 = vector.load %arg6[%c0_12, %c0_13] : memref<2x384xf32, #tpu.memory_space<vmem>>, vector<2x384xf32>
      %c0_14 = arith.constant 0 : index
      %c0_15 = arith.constant 0 : index
      %25 = vector.load %arg4[%c0_14, %c0_15] : memref<1x384xf32, #tpu.memory_space<vmem>>, vector<1x384xf32>
      %26 = vector.broadcast %25 : vector<1x384xf32> to vector<2x384xf32>
      %27 = arith.mulf %24, %26 : vector<2x384xf32>
      %28 = vector.shape_cast %27 : vector<2x384xf32> to vector<1x2x384xf32>
      %cst = arith.constant dense<0.000000e+00> : vector<1xf32>
      %29 = vector.multi_reduction <add>, %28, %cst [1, 2] : vector<1x2x384xf32> to vector<1xf32>
      %30 = vector.shape_cast %29 : vector<1xf32> to vector<1x1x1xf32>
      %31 = vector.extract %30[0, 0, 0] : f32 from vector<1x1x1xf32>
      %32 = vector.broadcast %31 : f32 to vector<1x1x1xf32>
      %c0_16 = arith.constant 0 : index
      %c0_17 = arith.constant 0 : index
      %c0_18 = arith.constant 0 : index
      %33 = vector.load %arg5[%c0_16, %c0_17, %c0_18] : memref<1x1x1xf32, #tpu.memory_space<vmem>>, vector<1x1x1xf32>
      tpu.vector_store %arg5[%c0_16, %c0_17, %c0_18], %32 {strides = array<i32>} : memref<1x1x1xf32, #tpu.memory_space<vmem>>, vector<1x1x1xf32>,
    } else {
    }
    return
  }
  func.func @transform_0(%arg0: i32, %arg1: i32) -> (i32, i32) {
    %c1_i32 = arith.constant 1 : i32
    %0 = arith.muli %arg0, %c1_i32 : i32
    %1 = arith.addi %0, %arg1 : i32
    %c0_i32 = arith.constant 0 : i32
    %2 = arith.minsi %1, %c0_i32 : i32
    %c0_i32_0 = arith.constant 0 : i32
    %c0_i32_1 = arith.constant 0 : i32
    return %2, %c0_i32_0 : i32, i32
  }
  func.func @transform_1(%arg0: i32, %arg1: i32) -> (i32, i32) {
    %c1_i32 = arith.constant 1 : i32
    %0 = arith.muli %arg0, %c1_i32 : i32
    %1 = arith.addi %0, %arg1 : i32
    %c0_i32 = arith.constant 0 : i32
    %2 = arith.minsi %1, %c0_i32 : i32
    %c0_i32_0 = arith.constant 0 : i32
    %c0_i32_1 = arith.constant 0 : i32
    return %2, %c0_i32_0 : i32, i32
  }
  func.func @transform_2(%arg0: i32, %arg1: i32) -> (i32, i32) {
    %c0_i32 = arith.constant 0 : i32
    %c0_i32_0 = arith.constant 0 : i32
    %c0_i32_1 = arith.constant 0 : i32
    return %c0_i32, %c0_i32_0 : i32, i32
  }
  func.func @transform_3(%arg0: i32, %arg1: i32) -> (i32, i32, i32) {
    %c0_i32 = arith.constant 0 : i32
    %c0_i32_0 = arith.constant 0 : i32
    %c0_i32_1 = arith.constant 0 : i32
    return %arg0, %c0_i32, %c0_i32_0 : i32, i32, i32
  }
}

</mosaic_0001>

<llo_original>
// kernel: tpu_custom_call.1
$region0: #{tpu_custom_call.1}
  #allocation0 [shape = 'u32[]', space=smem, size = 0x4, offset = 0x4, fixed_abs, tag = 'smem constant byte address 0x4 - core index']
  #allocation1 [shape = 'u32[72,128]{1,0:T(1,128)}', space=vmem, size = 0x9000, scoped, tag = 'internal scratch']
  #allocation2 [shape = 'f32[2,384]{1,0:T(2,128)}', space=vmem, size = 0xc00, scoped, tag = 'scratch operand']
  %s0 = inlined_call_operand.hbm [shape: f32[2,384], index: 0, kind: input, shape index: {}]
  %s1 = inlined_call_operand.hbm [shape: f32[2,384], index: 1, kind: input, shape index: {}]
  %s2 = inlined_call_operand.hbm [shape: f32[1,384], index: 2, kind: input, shape index: {}]
  %s3 = inlined_call_operand.hbm [shape: f32[1,1,1], index: 3, kind: output, shape index: {}]
  %s4 = sld [smem:[#allocation0]]
  $region50: #{tpu_custom_call.1} parent=0
    _
  %s6 = ssub.s32 1, %s4
  %s7 = scalar_select 0, %s6, %s4
  $region1: #{tpu_custom_call.1} parent=0
    #allocation3 [shape = 'u8[3072]{0}', space=vmem, size = 0xc00, scoped, tag = 'input window, operand 0, single buffered']
    #allocation4 [shape = 's32[1]{0}', space=sflag, size = 0x4, scoped, tag = 'scoped memory for tpu_custom_call.1']
    #allocation5 [shape = 's32[1]{0}', space=sflag, size = 0x4, scoped, tag = 'scoped memory for tpu_custom_call.1']
    #allocation6 [shape = 'u8[3072]{0}', space=vmem, size = 0xc00, scoped, tag = 'input window, operand 1, single buffered']
    #allocation7 [shape = 's32[1]{0}', space=sflag, size = 0x4, scoped, tag = 'scoped memory for tpu_custom_call.1']
    #allocation8 [shape = 'u8[1536]{0}', space=vmem, size = 0x800, scoped, tag = 'input window, operand 2, single buffered']
    #allocation9 [shape = 'u8[512]{0}', space=vmem, size = 0x400, scoped, tag = 'output window, operand 0, single buffered']
    %8 = vsyncpa [#allocation4], 0
    %9 = vsyncpa [#allocation7], 0
    %10 = vsyncpa [#allocation5], 0
    // Predicated region
    $region2: #{tpu_custom_call.1} parent=1 // pred_check
      _
    $region3: #{tpu_custom_call.1} parent=1 // pred_check_branch
      %12 = sbr.rel (0) target = $region5
    $region4: #{tpu_custom_call.1} parent=1 // pred_region
      %s13 = sadd.s32 0, 0
      %p14 = scmp.lt.s32.totalorder %s13, 0
      %s15 = scalar_select %p14, %s13, 0
      %17 = vsyncadd [#allocation4], 0
      %s18 = smul.addr %s15, 3
      %s19 = smul.addr %s18, 2
      %s20 = scalar_lea.hbm %s0, %s19
      %s22 = sshll.u32 %s20, 4
      %s23 = int_to_ptr.hbm [resolvable:$true] %s22
      %s24 = sshll.u32 [#allocation3], 4
      %s25 = int_to_ptr.vmem [resolvable:$true] %s24
      %27 = dma.hbm_to_vmem [thread:$0]  %s23, 96, %s25, [#allocation4]
    $region5: #{tpu_custom_call.1} parent=1 // pred_fallthru
      _
    // Predicated region
    $region6: #{tpu_custom_call.1} parent=1 // pred_check
      _
    $region7: #{tpu_custom_call.1} parent=1 // pred_check_branch
      %29 = sbr.rel (0) target = $region9
    $region8: #{tpu_custom_call.1} parent=1 // pred_region
      %s30 = sadd.s32 0, 0
      %p31 = scmp.lt.s32.totalorder %s30, 0
      %s32 = scalar_select %p31, %s30, 0
      %34 = vsyncadd [#allocation7], 0
      %s35 = smul.addr %s32, 3
      %s36 = smul.addr %s35, 2
      %s37 = scalar_lea.hbm %s1, %s36
      %s39 = sshll.u32 %s37, 4
      %s40 = int_to_ptr.hbm [resolvable:$true] %s39
      %s41 = sshll.u32 [#allocation6], 4
      %s42 = int_to_ptr.vmem [resolvable:$true] %s41
      %44 = dma.hbm_to_vmem [thread:$0]  %s40, 96, %s42, [#allocation7]
    $region9: #{tpu_custom_call.1} parent=1 // pred_fallthru
      _
    // Predicated region
    $region10: #{tpu_custom_call.1} parent=1 // pred_check
      _
    $region11: #{tpu_custom_call.1} parent=1 // pred_check_branch
      %46 = sbr.rel (0) target = $region13
    $region12: #{tpu_custom_call.1} parent=1 // pred_region
      %48 = vsyncadd [#allocation7], 0
      %s50 = sshll.u32 %s2, 4
      %s51 = int_to_ptr.hbm [resolvable:$true] %s50
      %s52 = sshll.u32 [#allocation8], 4
      %s53 = int_to_ptr.vmem [resolvable:$true] %s52
      %55 = dma.hbm_to_vmem [thread:$0]  %s51, 48, %s53, [#allocation7]
    $region13: #{tpu_custom_call.1} parent=1 // pred_fallthru
      _
    // Predicated region
    $region14: #{tpu_custom_call.1} parent=1 // pred_check
      _
    $region15: #{tpu_custom_call.1} parent=1 // pred_check_branch
      %57 = sbr.rel (0) target = $region17
    $region16: #{tpu_custom_call.1} parent=1 // pred_region
      %59 = dma.done [#allocation4], 96
    $region17: #{tpu_custom_call.1} parent=1 // pred_fallthru
      _
    // Predicated region
    $region18: #{tpu_custom_call.1} parent=1 // pred_check
      _
    $region19: #{tpu_custom_call.1} parent=1 // pred_check_branch
      %61 = sbr.rel (0) target = $region21
    $region20: #{tpu_custom_call.1} parent=1 // pred_region
      %63 = dma.done [#allocation7], 96
    $region21: #{tpu_custom_call.1} parent=1 // pred_fallthru
      _
    // Predicated region
    $region22: #{tpu_custom_call.1} parent=1 // pred_check
      _
    $region23: #{tpu_custom_call.1} parent=1 // pred_check_branch
      %65 = sbr.rel (0) target = $region25
    $region24: #{tpu_custom_call.1} parent=1 // pred_region
      %67 = dma.done [#allocation7], 48
    $region25: #{tpu_custom_call.1} parent=1 // pred_fallthru
      _
    %s68 = sadd.s32 0, 0
    %p69 = scmp.lt.s32.totalorder %s68, 0
    %s70 = scalar_select %p69, %s68, 0
    %s71 = sadd.s32 0, 0
    %p72 = scmp.lt.s32.totalorder %s71, 0
    %s73 = scalar_select %p72, %s71, 0
    %p74 = scmp.eq.s32.totalorder 0, 0
    // Predicated region
    $region26: #{tpu_custom_call.1} parent=1 // pred_check
      %p75 = pneg %p74
    $region27: #{tpu_custom_call.1} parent=1 // pred_check_branch
      %77 = sbr.rel (%p75) target = $region29
    $region28: #{tpu_custom_call.1} parent=1 // pred_region
      %78 = vst [vmem:[#allocation2] sm:$0x3f] 0.0
    $region29: #{tpu_custom_call.1} parent=1 // pred_fallthru
      _
    %v79 = vld [vmem:[#allocation6] sm:$0x3f]
    %v80 = vld [vmem:[#allocation3] sm:$0x3f]
    %v81 = vsub.f32 %v79, %v80
    %v82 = vmul.f32 %v81, %v81
    %84 = vst [vmem:[#allocation1] ss:$4 sm:$0xff] %v82
    %v85 = vld.sshfl [vmem:[#allocation1] sm:$0xff pattern:$0x73625140]
    %v86 = vld.sshfl [vmem:[#allocation1 + $0x8] sm:$0xff pattern:$0x73625140]
    %v87 = vld.sshfl [vmem:[#allocation1 + $0x10] sm:$0xff pattern:$0x73625140]
    %91 = vrot.lane.b32.xlu0 %v85, 1
    %v92 = vpop.permute.xlu0 %91
    %93 = vrot.lane.b32.xlu0 %v86, 1
    %v94 = vpop.permute.xlu0 %93
    %95 = vrot.lane.b32.xlu0 %v87, 1
    %v96 = vpop.permute.xlu0 %95
    %v97 = vlaneseq
    %v98 = vand.u32 %v97, 127
    %vm99 = vcmp.lt.s32.totalorder %v98, 1
    %v100 = vsel %vm99, %v94, %v96
    %v101 = vsel %vm99, %v92, %v94
    %v102 = vsel %vm99, %v96, %v92
    %v106 = vrot.slane %v101, 6
    %v107 = vrot.slane %v100, 4
    %vm108 = vcmask 1041408
    %v109 = vsel %vm108, %v102, %v106
    %vm110 = vcmask 1043456
    %v111 = vsel %vm110, %v109, %v107
    %v113 = vadd.f32 %v82, %v111
    %114 = vst [vmem:[#allocation1] ss:$4 sm:$0xff] %v82
    %v115 = vld.sshfl [vmem:[#allocation1] sm:$0xff pattern:$0x73625140]
    %v116 = vld.sshfl [vmem:[#allocation1 + $0x8] sm:$0xff pattern:$0x73625140]
    %v117 = vld.sshfl [vmem:[#allocation1 + $0x10] sm:$0xff pattern:$0x73625140]
    %121 = vrot.lane.b32.xlu0 %v115, 127
    %v122 = vpop.permute.xlu0 %121
    %123 = vrot.lane.b32.xlu0 %v116, 127
    %v124 = vpop.permute.xlu0 %123
    %125 = vrot.lane.b32.xlu0 %v117, 127
    %v126 = vpop.permute.xlu0 %125
    %vm127 = vcmp.lt.s32.totalorder %v98, 127
    %v128 = vsel %vm127, %v124, %v126
    %v129 = vsel %vm127, %v122, %v124
    %v130 = vsel %vm127, %v126, %v122
    %v134 = vrot.slane %v128, 6
    %v135 = vrot.slane %v130, 4
    %v136 = vsel %vm108, %v129, %v134
    %v137 = vsel %vm110, %v136, %v135
    %v139 = vadd.f32 %v113, %v137
    %s140 = sadd.s32 0, 0
    %s141 = smul.u32 %s140, 2
    %s142 = ssub.s32 2, %s141
    %p143 = scmp.ge.s32.totalorder %s142, 2
    // Predicated region
    $region30: #{tpu_custom_call.1} parent=1 // pred_check
      %p144 = pneg %p143
    $region31: #{tpu_custom_call.1} parent=1 // pred_check_branch
      %146 = sbr.rel (%p144) target = $region33
    $region32: #{tpu_custom_call.1} parent=1 // pred_region
      %v147 = vld [vmem:[#allocation2] sm:$0x3f]
      %v148 = vrsqrt.pop %v139
      %v149 = vmul.f32 %v148, %v139
      %v150 = vmul.f32 %v149, %v148
      %v151 = vmul.f32 0.5, %v150
      %v152 = vsub.f32 1.5, %v151
      %v153 = vmul.f32 %v148, %v152
      %v154 = vmul.f32 %v139, %v153
      %vm155 = vcmp.eq.f32.partialorder %v139, inf
      %v156 = vsel %vm155, %v139, %v154
      %vm157 = vcmp.eq.f32.partialorder %v139, 0.0
      %v158 = vand.u32 %v139, 2147483648
      %v159 = vsel %vm157, %v158, %v156
      %v160 = vadd.f32 %v147, %v159
      %161 = vst [vmem:[#allocation2] sm:$0x3f] %v160
    $region33: #{tpu_custom_call.1} parent=1 // pred_fallthru
      _
    %p162 = scmp.lt.s32.totalorder %s142, 2
    // Predicated region
    $region34: #{tpu_custom_call.1} parent=1 // pred_check
      %p163 = pneg %p162
    $region35: #{tpu_custom_call.1} parent=1 // pred_check_branch
      %165 = sbr.rel (%p163) target = $region37
    $region36: #{tpu_custom_call.1} parent=1 // pred_region
      %v166 = vlaneseq
      %v167 = vshrl.u32 %v166, 7
      %v168 = vld [vmem:[#allocation2] sm:$0x3f]
      %v169 = vstv %s142
      %vm170 = vcmp.lt.s32.totalorder %v167, %v169
      %172 = vst [vmem:[#allocation1] ss:$4 sm:$0xff] %v139
      %v173 = vld.sshfl [vmem:[#allocation1] sm:$0xff pattern:$0x73625140]
      %v174 = vld.sshfl [vmem:[#allocation1 + $0x8] sm:$0xff pattern:$0x73625140]
      %v175 = vld.sshfl [vmem:[#allocation1 + $0x10] sm:$0xff pattern:$0x73625140]
      %v179 = vsel %vm170, %v173, 0.0
      %v180 = vsel %vm170, %v174, 0.0
      %v181 = vsel %vm170, %v175, 0.0
      %v182 = vrsqrt.pop %v179
      %v183 = vmul.f32 %v182, %v179
      %v184 = vmul.f32 %v183, %v182
      %v185 = vmul.f32 0.5, %v184
      %v186 = vsub.f32 1.5, %v185
      %v187 = vmul.f32 %v182, %v186
      %v188 = vmul.f32 %v179, %v187
      %vm189 = vcmp.eq.f32.partialorder %v179, inf
      %v190 = vsel %vm189, %v179, %v188
      %vm191 = vcmp.eq.f32.partialorder %v179, 0.0
      %v192 = vand.u32 %v179, 2147483648
      %v193 = vsel %vm191, %v192, %v190
      %v194 = vrsqrt.pop %v180
      %v195 = vmul.f32 %v194, %v180
      %v196 = vmul.f32 %v195, %v194
      %v197 = vmul.f32 0.5, %v196
      %v198 = vsub.f32 1.5, %v197
      %v199 = vmul.f32 %v194, %v198
      %v200 = vmul.f32 %v180, %v199
      %vm201 = vcmp.eq.f32.partialorder %v180, inf
      %v202 = vsel %vm201, %v180, %v200
      %vm203 = vcmp.eq.f32.partialorder %v180, 0.0
      %v204 = vand.u32 %v180, 2147483648
      %v205 = vsel %vm203, %v204, %v202
      %v206 = vrsqrt.pop %v181
      %v207 = vmul.f32 %v206, %v181
      %v208 = vmul.f32 %v207, %v206
      %v209 = vmul.f32 0.5, %v208
      %v210 = vsub.f32 1.5, %v209
      %v211 = vmul.f32 %v206, %v210
      %v212 = vmul.f32 %v181, %v211
      %vm213 = vcmp.eq.f32.partialorder %v181, inf
      %v214 = vsel %vm213, %v181, %v212
      %vm215 = vcmp.eq.f32.partialorder %v181, 0.0
      %v216 = vand.u32 %v181, 2147483648
      %v217 = vsel %vm215, %v216, %v214
      %v221 = vrot.slane %v205, 6
      %v222 = vrot.slane %v217, 4
      %v223 = vsel %vm108, %v193, %v221
      %v224 = vsel %vm110, %v223, %v222
      %v226 = vadd.f32 %v168, %v224
      %227 = vst [vmem:[#allocation2] sm:$0x3f] %v226
    $region37: #{tpu_custom_call.1} parent=1 // pred_fallthru
      _
    // Predicated region
    $region38: #{tpu_custom_call.1} parent=1 // pred_check
      %p228 = pneg %p74
    $region39: #{tpu_custom_call.1} parent=1 // pred_check_branch
      %230 = sbr.rel (%p228) target = $region41
    $region40: #{tpu_custom_call.1} parent=1 // pred_region
      %v231 = vld [vmem:[#allocation2] sm:$0x3f]
      %v232 = vld [vmem:[#allocation8] sm:$0x7]
      %v234 = vperm.slane %v232, 0
      %v235 = vperm.slane %v232, 1
      %v236 = vperm.slane %v232, 2
      %v237 = vrot.slane %v235, 6
      %v238 = vrot.slane %v236, 4
      %v239 = vsel %vm108, %v234, %v237
      %v240 = vsel %vm110, %v239, %v238
      %v242 = vmul.f32 %v231, %v240
      %244 = vst [vmem:[#allocation1] ss:$4 sm:$0xff] %v242
      %v245 = vld.sshfl [vmem:[#allocation1] sm:$0xff pattern:$0x73625140]
      %v246 = vld.sshfl [vmem:[#allocation1 + $0x8] sm:$0xff pattern:$0x73625140]
      %v247 = vld.sshfl [vmem:[#allocation1 + $0x10] sm:$0xff pattern:$0x73625140]
      %v251 = vsel %vm108, %v245, 0.0
      %v252 = vsel %vm108, %v246, 0.0
      %v253 = vadd.f32 %v251, %v252
      %v254 = vsel %vm108, %v247, 0.0
      %v255 = vadd.f32 %v253, %v254
      %256 = vadd.xlane.f32.xlu0 %v255
      %v257 = vpop.xlane.xlu0 %256
      %v258 = vrot.slane %v257, 4
      %v259 = vadd.f32 %v257, %v258
      %v260 = vrot.slane %v259, 2
      %v261 = vadd.f32 %v259, %v260
      %v262 = vrot.slane %v261, 1
      %v263 = vadd.f32 %v261, %v262
      %s264 = vtos %v263
      %v265 = vstv %s264
      %vm266 = vcmask 0
      %267 = vst.msk [vmem:[#allocation9] sm:$0x1] %vm266, %v265
    $region41: #{tpu_custom_call.1} parent=1 // pred_fallthru
      _
    // Predicated region
    $region42: #{tpu_custom_call.1} parent=1 // pred_check
      _
    $region43: #{tpu_custom_call.1} parent=1 // pred_check_branch
      %269 = sbr.rel (0) target = $region45
    $region44: #{tpu_custom_call.1} parent=1 // pred_region
      %271 = vsyncadd [#allocation5], 0
      %s273 = sshll.u32 [#allocation9], 4
      %s274 = int_to_ptr.vmem [resolvable:$true] %s273
      %s275 = sshll.u32 %s3, 4
      %s276 = int_to_ptr.hbm [resolvable:$true] %s275
      %278 = dma.vmem_to_hbm [thread:$0]  %s274, 16, %s276, [#allocation5]
    $region45: #{tpu_custom_call.1} parent=1 // pred_fallthru
      _
    // Predicated region
    $region46: #{tpu_custom_call.1} parent=1 // pred_check
      _
    $region47: #{tpu_custom_call.1} parent=1 // pred_check_branch
      %280 = sbr.rel (0) target = $region49
    $region48: #{tpu_custom_call.1} parent=1 // pred_region
      %282 = dma.done [#allocation5], 16
    $region49: #{tpu_custom_call.1} parent=1 // pred_fallthru
      _
    %283 = vsyncpa [#allocation4], 1
    %284 = vsyncpa [#allocation7], 1
    %285 = vsyncpa [#allocation5], 1

</llo_original>
